<compile_context>
chip_gen: v6e
topology: v6e:2x2x1
jax: 0.10.0
libtpu: 0.0.40
codegen_flags: <defaults>
</compile_context>

<pallas_src>
import jax
import jax.numpy as jnp
from jax.experimental import pallas as pl
from jax.experimental.pallas import tpu as pltpu

_LANES = 128


def linear_kernel(wb_ref, x_ref, o_ref):
    # wb_ref: (2,) in SMEM -> [w, b] scalars; x_ref/o_ref: (TM, 128) VMEM tiles.
    w = wb_ref[0]
    b = wb_ref[1]
    o_ref[...] = x_ref[...] * w + b


def linear_regression_v2(
    x: jax.Array,
    weight: jax.Array,
    bias: jax.Array,
    *,
    block_rows: int = 512,
    min_kernel_elems: int = 1024,
) -> jax.Array:
    """x: [N, 1], weight: [1, 1], bias: [1]  ->  [N, 1] (matches nn.Linear(1, 1))."""
    n = x.shape[0]
    w = weight.reshape(()).astype(x.dtype)
    b = bias.reshape(()).astype(x.dtype)

    # Tiny inputs: kernel launch + DMA setup dwarfs the FMAs -> plain jnp.
    if n * x.shape[1] < min_kernel_elems:
        return x * w + b

    # Lane-dense repack: (N, 1) -> flat (N,) -> pad -> (rows_padded, 128).
    flat = x.reshape(-1)
    rows = pl.cdiv(n, _LANES)
    tm = min(block_rows, ((rows + 7) // 8) * 8)          # rows per tile, multiple of 8
    rows_padded = ((rows + tm - 1) // tm) * tm           # whole number of tiles
    padded_len = rows_padded * _LANES
    if padded_len != n:
        flat = jnp.pad(flat, (0, padded_len - n))
    x2d = flat.reshape(rows_padded, _LANES)

    wb = jnp.stack([w, b])                               # (2,) scalar params for SMEM

    out2d = pl.pallas_call(
        linear_kernel,
        out_shape=jax.ShapeDtypeStruct((rows_padded, _LANES), x.dtype),
        grid=(rows_padded // tm,),
        in_specs=[
            pl.BlockSpec(memory_space=pltpu.MemorySpace.SMEM),   # w, b as SMEM scalars
            pl.BlockSpec((tm, _LANES), lambda i: (i, 0)),        # lane-dense x tile
        ],
        out_specs=pl.BlockSpec((tm, _LANES), lambda i: (i, 0)),  # unmasked full-lane stores
        compiler_params=pltpu.CompilerParams(
            dimension_semantics=("parallel",),                   # shard rows across TCs (v7x)
        ),
    )(wb, x2d)

    # Drop the padded tail and restore the (N, 1) PyTorch layout.
    return out2d.reshape(-1)[:n].reshape(n, 1)


if __name__ == "__main__":
    key = jax.random.PRNGKey(0)

    # nn.Linear(1, 1) parameters (deterministic).
    weight = jnp.array([[0.7]], dtype=jnp.float32)  # [out_features, in_features]
    bias = jnp.array([0.3], dtype=jnp.float32)      # [out_features]

    # 1) Kernel path: moderate N, deliberately ragged (not a multiple of 128)
    #    to exercise the pad -> compute -> slice-back path.
    k1, k2 = jax.random.split(key)
    x_big = jax.random.normal(k1, (3000, 1), dtype=jnp.float32)
    y_big = linear_regression_v2(x_big, weight, bias)
    jax.block_until_ready(y_big)
    y_big_ref = x_big @ weight.T + bias
    assert y_big.shape == (3000, 1)
    assert jnp.allclose(y_big, y_big_ref, atol=1e-6), "kernel-path mismatch vs reference"

    # 2) Tiny-N bypass path (plain jnp): N=8 like the original example.
    x_small = jax.random.normal(k2, (8, 1), dtype=jnp.float32)
    y_small = linear_regression_v2(x_small, weight, bias)
    jax.block_until_ready(y_small)
    y_small_ref = x_small @ weight.T + bias
    assert y_small.shape == (8, 1)
    assert jnp.allclose(y_small, y_small_ref, atol=1e-6), "bypass-path mismatch vs reference"

    print("KERNEL_OK")
</pallas_src>

<mosaic_0001>
module attributes {stable_mosaic.version = 11 : i64} {
  func.func @linear_kernel(%arg0: i32, %arg1: memref<2xf32, #tpu.memory_space<smem>>, %arg2: memref<24x128xf32, #tpu.memory_space<vmem>>, %arg3: memref<24x128xf32, #tpu.memory_space<vmem>>) attributes {dimension_semantics = [#tpu.dimension_semantics<parallel>], iteration_bounds = array<i64: 1>, scalar_prefetch = 0 : i64, scratch_operands = 0 : i64, tpu.core_type = #tpu.core_type<tc>, window_params = [{transform_indices = @transform_0, window_bounds = array<i64: 2>}, {transform_indices = @transform_1, window_bounds = array<i64: 24, 128>}, {transform_indices = @transform_2, window_bounds = array<i64: 24, 128>}]} {
    %c0 = arith.constant 0 : index
    %0 = memref.load %arg1[%c0] : memref<2xf32, #tpu.memory_space<smem>>
    %c1 = arith.constant 1 : index
    %1 = memref.load %arg1[%c1] : memref<2xf32, #tpu.memory_space<smem>>
    %c0_0 = arith.constant 0 : index
    %c0_1 = arith.constant 0 : index
    %2 = vector.load %arg2[%c0_0, %c0_1] : memref<24x128xf32, #tpu.memory_space<vmem>>, vector<24x128xf32>
    %3 = vector.broadcast %0 : f32 to vector<24x128xf32>
    %4 = arith.mulf %2, %3 : vector<24x128xf32>
    %5 = vector.broadcast %1 : f32 to vector<24x128xf32>
    %6 = arith.addf %4, %5 : vector<24x128xf32>
    %c0_2 = arith.constant 0 : index
    %c0_3 = arith.constant 0 : index
    %7 = vector.load %arg3[%c0_2, %c0_3] : memref<24x128xf32, #tpu.memory_space<vmem>>, vector<24x128xf32>
    tpu.vector_store %arg3[%c0_2, %c0_3], %6 {strides = array<i32>} : memref<24x128xf32, #tpu.memory_space<vmem>>, vector<24x128xf32>,
    return
  }
  func.func @transform_0(%arg0: i32) -> i32 {
    %c0_i32 = arith.constant 0 : i32
    %c0_i32_0 = arith.constant 0 : i32
    return %c0_i32 : i32
  }
  func.func @transform_1(%arg0: i32) -> (i32, i32) {
    %c0_i32 = arith.constant 0 : i32
    %c0_i32_0 = arith.constant 0 : i32
    return %arg0, %c0_i32 : i32, i32
  }
  func.func @transform_2(%arg0: i32) -> (i32, i32) {
    %c0_i32 = arith.constant 0 : i32
    %c0_i32_0 = arith.constant 0 : i32
    return %arg0, %c0_i32 : i32, i32
  }
}

</mosaic_0001>

<llo_original>
// kernel: tpu_custom_call.1
$region0: #{tpu_custom_call.1}
  #allocation0 [shape = 'u32[]', space=smem, size = 0x4, offset = 0x4, fixed_abs, tag = 'smem constant byte address 0x4 - core index']
  #allocation1 [shape = 'u32[144,128]{1,0:T(1,128)}', space=vmem, size = 0x12000, scoped, tag = 'internal scratch']
  %s0 = inlined_call_operand.hbm [shape: f32[2], index: 0, kind: input, shape index: {}]
  %s1 = inlined_call_operand.hbm [shape: f32[24,128], index: 1, kind: input, shape index: {}]
  %s2 = inlined_call_operand.hbm [shape: f32[24,128], index: 2, kind: output, shape index: {}]
  %s3 = sld [smem:[#allocation0]]
  $region26: #{tpu_custom_call.1} parent=0
    _
  %s5 = ssub.s32 1, %s3
  %s6 = scalar_select 0, %s5, %s3
  $region1: #{tpu_custom_call.1} parent=0
    #allocation2 [shape = 'u8[512]{0}', space=smem, size = 0x200, scoped, tag = 'input window, operand 0, single buffered']
    #allocation3 [shape = 's32[1]{0}', space=sflag, size = 0x4, scoped, tag = 'scoped memory for tpu_custom_call.1']
    #allocation4 [shape = 's32[1]{0}', space=sflag, size = 0x4, scoped, tag = 'scoped memory for tpu_custom_call.1']
    #allocation5 [shape = 's32[1]{0}', space=sflag, size = 0x4, scoped, tag = 'scoped memory for tpu_custom_call.1']
    #allocation6 [shape = 'u8[12288]{0}', space=vmem, size = 0x3000, scoped, tag = 'input window, operand 1, single buffered']
    #allocation7 [shape = 'u8[12288]{0}', space=vmem, size = 0x3000, scoped, tag = 'output window, operand 0, single buffered']
    %7 = vsyncpa [#allocation5], 0
    %8 = vsyncpa [#allocation3], 0
    %9 = vsyncpa [#allocation4], 0
    // Predicated region
    $region2: #{tpu_custom_call.1} parent=1 // pred_check
      _
    $region3: #{tpu_custom_call.1} parent=1 // pred_check_branch
      %11 = sbr.rel (0) target = $region5
    $region4: #{tpu_custom_call.1} parent=1 // pred_region
      %s13 = ssub.s32 16, 16
      %14 = vsyncadd [#allocation5], %s13
      %17 = dma.hbm_to_smem %s0, 16, [#allocation2], [#allocation5]
    $region5: #{tpu_custom_call.1} parent=1 // pred_fallthru
      _
    // Predicated region
    $region6: #{tpu_custom_call.1} parent=1 // pred_check
      _
    $region7: #{tpu_custom_call.1} parent=1 // pred_check_branch
      %19 = sbr.rel (0) target = $region9
    $region8: #{tpu_custom_call.1} parent=1 // pred_region
      %s21 = ssub.s32 384, 384
      %22 = vsyncadd [#allocation3], %s21
      %s23 = sshll.u32 [#allocation6], 4
      %s24 = int_to_ptr.vmem [resolvable:$true] %s23
      %29 = dma.hbm_to_vmem [thread:$0]  %s1, 384, %s24, [#allocation3], 128, 128, 8
    $region9: #{tpu_custom_call.1} parent=1 // pred_fallthru
      _
    // Predicated region
    $region10: #{tpu_custom_call.1} parent=1 // pred_check
      _
    $region11: #{tpu_custom_call.1} parent=1 // pred_check_branch
      %31 = sbr.rel (0) target = $region13
    $region12: #{tpu_custom_call.1} parent=1 // pred_region
      %32 = dma.done [#allocation5], 16
    $region13: #{tpu_custom_call.1} parent=1 // pred_fallthru
      _
    // Predicated region
    $region14: #{tpu_custom_call.1} parent=1 // pred_check
      _
    $region15: #{tpu_custom_call.1} parent=1 // pred_check_branch
      %34 = sbr.rel (0) target = $region17
    $region16: #{tpu_custom_call.1} parent=1 // pred_region
      %35 = dma.done [#allocation3], 384
    $region17: #{tpu_custom_call.1} parent=1 // pred_fallthru
      _
    %36 = sfence
    %s37 = sld [smem:[#allocation2]]
    %s38 = sld [smem:[#allocation2 + $0x1]]
    %v39 = vld [vmem:[#allocation6] sm:$0xff]
    %v40 = vld [vmem:[#allocation6 + $0x8] sm:$0xff]
    %v41 = vld [vmem:[#allocation6 + $0x10] sm:$0xff]
    %v42 = vstv %s37
    %v43 = vmul.f32 %v39, %v42
    %v44 = vmul.f32 %v40, %v42
    %v45 = vmul.f32 %v41, %v42
    %v46 = vstv %s38
    %v47 = vadd.f32 %v43, %v46
    %v48 = vadd.f32 %v44, %v46
    %v49 = vadd.f32 %v45, %v46
    %50 = vst [vmem:[#allocation7] sm:$0xff] %v47
    %51 = vst [vmem:[#allocation7 + $0x8] sm:$0xff] %v48
    %52 = vst [vmem:[#allocation7 + $0x10] sm:$0xff] %v49
    // Predicated region
    $region18: #{tpu_custom_call.1} parent=1 // pred_check
      _
    $region19: #{tpu_custom_call.1} parent=1 // pred_check_branch
      %54 = sbr.rel (0) target = $region21
    $region20: #{tpu_custom_call.1} parent=1 // pred_region
      %s56 = ssub.s32 384, 384
      %57 = vsyncadd [#allocation4], %s56
      %s58 = sshll.u32 [#allocation7], 4
      %s59 = int_to_ptr.vmem [resolvable:$true] %s58
      %64 = dma.vmem_to_hbm [thread:$0]  %s59, 384, %s2, [#allocation4], 128, 128, 8
    $region21: #{tpu_custom_call.1} parent=1 // pred_fallthru
      _
    // Predicated region
    $region22: #{tpu_custom_call.1} parent=1 // pred_check
      _
    $region23: #{tpu_custom_call.1} parent=1 // pred_check_branch
      %66 = sbr.rel (0) target = $region25
    $region24: #{tpu_custom_call.1} parent=1 // pred_region
      %67 = dma.done [#allocation4], 384
    $region25: #{tpu_custom_call.1} parent=1 // pred_fallthru
      _
    %68 = vsyncpa [#allocation3], 1
    %69 = vsyncpa [#allocation4], 1
    %70 = vsyncpa [#allocation5], 1

</llo_original>
